<compile_context>
chip_gen: v6e
topology: v6e:2x2x1
jax: 0.10.0
libtpu: 0.0.40
codegen_flags: <defaults>
</compile_context>

<pallas_src>
import jax
import jax.numpy as jnp
from jax.experimental import pallas as pl
from jax.experimental.pallas import tpu as pltpu


# ---------------------------------------------------------------------------
# Kernel
# ---------------------------------------------------------------------------
def _patch_embed_kernel(x_ref, w_ref, b_ref, o_ref):
    # x_ref: (tile_m, patch_size)   w_ref: (patch_size, embed_dim)
    # b_ref: (1, embed_dim) f32     o_ref: (tile_m, embed_dim)  lane-dense (256)
    y = jnp.dot(x_ref[...], w_ref[...], preferred_element_type=jnp.float32)
    o_ref[...] = (y + b_ref[...]).astype(o_ref.dtype)


# ---------------------------------------------------------------------------
# Hardware-aware tiling helpers
# ---------------------------------------------------------------------------
def _tpu_topology():
    """Return (num_tensorcores_per_device, per-core VMEM budget for row tiles)."""
    num_tc, budget = 1, 24 * 1024 * 1024           # v5e / v6e: 1 TC, 32 MiB scoped VMEM
    try:
        kind = jax.devices()[0].device_kind.lower()
    except Exception:
        return num_tc, budget
    if ("v7" in kind) or ("7x" in kind):           # v7x: 2 TCs, 64 MiB physical VMEM
        num_tc, budget = 2, 10 * 1024 * 1024
    elif "v4" in kind:                             # v4 megacore: 2 TCs per device
        num_tc, budget = 2, 16 * 1024 * 1024
    return num_tc, budget


def _round_up(x, m):
    return ((x + m - 1) // m) * m


def _choose_tile_m(M, *, num_tc, vmem_budget, patch_size, embed_dim,
                   in_bytes, out_bytes, row_align):
    """Largest row tile that (a) fits the per-core VMEM budget with double
    buffering, (b) is row_align-aligned, (c) splits M across num_tc cores."""
    k_pad = _round_up(patch_size, 128)             # lane padding of the K axis in VMEM
    per_row = 2 * (k_pad * in_bytes + embed_dim * out_bytes)     # x + out, double-buffered
    resident = 2 * (patch_size * embed_dim + embed_dim) * max(in_bytes, 4)  # weight + bias
    cap = max(row_align, (max(vmem_budget - resident, per_row) // per_row))
    cap = min(cap, 2048)                           # >=512-row tiles already ~85% of roofline
    cap = max(row_align, (cap // row_align) * row_align)

    per_core = -(-M // num_tc)                     # ceil-div: rows per TensorCore
    tile = min(per_core, cap)
    if tile >= M:
        return M                                   # single full block: always layout-legal
    tile = _round_up(tile, row_align)
    return M if tile >= M else tile


# ---------------------------------------------------------------------------
# Public wrapper
# ---------------------------------------------------------------------------
def patch_embed_2w(x, w, b, *, patch_size, embed_dim,
                   use_bf16=False, prefer_pallas=None):
    """Pallas implementation of PatchEmbed2W.forward.

    x : (B, in_chans, signal_length)
    w : (patch_size, embed_dim)   -- PyTorch t_patch.weight TRANSPOSED to (in, out)
    b : (embed_dim,) or (1, embed_dim)
    returns (B, in_chans * num_patches, embed_dim)
    """
    B, C, L = x.shape
    assert L % patch_size == 0, "Signal length must be divisible by patch size"
    assert w.shape == (patch_size, embed_dim), \
        "w must be t_patch.weight transposed to (patch_size, embed_dim)"
    num_patches = L // patch_size
    M = B * C * num_patches
    out_dtype = x.dtype
    b2d = jnp.asarray(b).reshape(1, embed_dim)

    # unfold(step == size) + .view(...) == contiguous reshape -> one big GEMM.
    x2d = x.reshape(M, patch_size)

    # Tiny problems are launch/DMA-latency bound and a standalone pallas_call is
    # a fusion barrier; let XLA handle them unless the caller forces Pallas.
    if prefer_pallas is None:
        prefer_pallas = M >= 1024
    if not prefer_pallas:
        y = jnp.dot(x2d, w, preferred_element_type=jnp.float32) + b2d
        return y.astype(out_dtype).reshape(B, C * num_patches, embed_dim)

    compute_dtype = jnp.bfloat16 if use_bf16 else x.dtype
    xk = x2d.astype(compute_dtype)
    wk = w.astype(compute_dtype)
    bk = b2d.astype(jnp.float32)                   # bias added to the f32 accumulator

    num_tc, vmem_budget = _tpu_topology()
    row_align = 16 if compute_dtype == jnp.bfloat16 else 8
    in_bytes = jnp.dtype(compute_dtype).itemsize
    out_bytes = jnp.dtype(out_dtype).itemsize
    tile_m = _choose_tile_m(M, num_tc=num_tc, vmem_budget=vmem_budget,
                            patch_size=patch_size, embed_dim=embed_dim,
                            in_bytes=in_bytes, out_bytes=out_bytes,
                            row_align=row_align)
    grid = (pl.cdiv(M, tile_m),)

    cost = pl.CostEstimate(
        flops=2 * M * patch_size * embed_dim,
        transcendentals=0,
        bytes_accessed=(M * patch_size * in_bytes
                        + patch_size * embed_dim * in_bytes
                        + embed_dim * 4
                        + M * embed_dim * out_bytes),
    )

    out2d = pl.pallas_call(
        _patch_embed_kernel,
        out_shape=jax.ShapeDtypeStruct((M, embed_dim), out_dtype),
        grid=grid,
        in_specs=[
            pl.BlockSpec((tile_m, patch_size), lambda i: (i, 0)),    # activations
            pl.BlockSpec((patch_size, embed_dim), lambda i: (0, 0)),  # weight (resident)
            pl.BlockSpec((1, embed_dim), lambda i: (0, 0)),           # bias (resident)
        ],
        out_specs=pl.BlockSpec((tile_m, embed_dim), lambda i: (i, 0)),  # lane-dense (256)
        compiler_params=pltpu.CompilerParams(
            dimension_semantics=("parallel",)),
        cost_estimate=cost,
    )(xk, wk, bk)

    return out2d.reshape(B, C * num_patches, embed_dim)


# ---------------------------------------------------------------------------
# Reference + init
# ---------------------------------------------------------------------------
def reference_patch_embed(x, w, b, *, patch_size, embed_dim):
    """Plain-JAX reference mirroring the PyTorch forward pass."""
    B, C, L = x.shape
    n = L // patch_size
    xp = x.reshape(B, C, n, patch_size)            # == torch unfold(2, p, p)
    y = xp @ w + jnp.asarray(b).reshape(1, embed_dim)
    return y.reshape(B, C * n, embed_dim)          # == .view(B, C*n, embed_dim)


def init_params(key, patch_size, embed_dim):
    """Deterministic init matching nn.Linear(patch_size, embed_dim); weight is
    stored transposed as (in, out) for the kernel."""
    kw, kb = jax.random.split(key)
    bound = 1.0 / (patch_size ** 0.5)
    w = jax.random.uniform(kw, (patch_size, embed_dim), jnp.float32, -bound, bound)
    b = jax.random.uniform(kb, (1, embed_dim), jnp.float32, -bound, bound)
    return w, b


if __name__ == "__main__":
    # Shapes implied by the module defaults: (B, in_chans=12, signal_length=1000)
    B, in_chans, signal_length = 2, 12, 1000
    patch_size, embed_dim = 100, 256
    num_patches = signal_length // patch_size

    root = jax.random.PRNGKey(0)
    kx, kp = jax.random.split(root)
    x = jax.random.normal(kx, (B, in_chans, signal_length), jnp.float32)
    w, b = init_params(kp, patch_size, embed_dim)

    ref = reference_patch_embed(x, w, b, patch_size=patch_size, embed_dim=embed_dim)

    # 1) Pallas f32 path (forced, so the kernel definitely runs).
    out = patch_embed_2w(x, w, b, patch_size=patch_size, embed_dim=embed_dim,
                         prefer_pallas=True)
    out = jax.block_until_ready(out)
    assert out.shape == (B, in_chans * num_patches, embed_dim)
    assert jnp.allclose(out, ref, atol=1e-4, rtol=1e-4), "f32 Pallas mismatch vs reference"

    # 2) Pallas bf16-compute path (f32 accumulation) — looser tolerance.
    out_bf16 = patch_embed_2w(x, w, b, patch_size=patch_size, embed_dim=embed_dim,
                              prefer_pallas=True, use_bf16=True)
    out_bf16 = jax.block_until_ready(out_bf16)
    assert jnp.allclose(out_bf16, ref, atol=1e-1, rtol=1e-1), "bf16 Pallas mismatch"

    # 3) Auto-dispatch path (tiny M -> XLA einsum) stays numerically identical.
    out_auto = jax.block_until_ready(
        patch_embed_2w(x, w, b, patch_size=patch_size, embed_dim=embed_dim))
    assert jnp.allclose(out_auto, ref, atol=1e-4, rtol=1e-4), "auto path mismatch"

    print("KERNEL_OK")
</pallas_src>

<mosaic_0001>
module attributes {stable_mosaic.version = 11 : i64} {
  func.func @_patch_embed_kernel(%arg0: i32, %arg1: memref<240x100xf32, #tpu.memory_space<vmem>>, %arg2: memref<100x256xf32, #tpu.memory_space<vmem>>, %arg3: memref<1x256xf32, #tpu.memory_space<vmem>>, %arg4: memref<240x256xf32, #tpu.memory_space<vmem>>) attributes {dimension_semantics = [#tpu.dimension_semantics<parallel>], iteration_bounds = array<i64: 1>, scalar_prefetch = 0 : i64, scratch_operands = 0 : i64, tpu.core_type = #tpu.core_type<tc>, window_params = [{transform_indices = @transform_0, window_bounds = array<i64: 240, 100>}, {pipeline_mode = #tpu.pipeline_mode<synchronous>, transform_indices = @transform_1, window_bounds = array<i64: 100, 256>}, {pipeline_mode = #tpu.pipeline_mode<synchronous>, transform_indices = @transform_2, window_bounds = array<i64: 1, 256>}, {transform_indices = @transform_3, window_bounds = array<i64: 240, 256>}]} {
    %c0 = arith.constant 0 : index
    %c0_0 = arith.constant 0 : index
    %0 = vector.load %arg1[%c0, %c0_0] : memref<240x100xf32, #tpu.memory_space<vmem>>, vector<240x100xf32>
    %c0_1 = arith.constant 0 : index
    %c0_2 = arith.constant 0 : index
    %1 = vector.load %arg2[%c0_1, %c0_2] : memref<100x256xf32, #tpu.memory_space<vmem>>, vector<100x256xf32>
    %cst = arith.constant dense<0.000000e+00> : vector<240x256xf32>
    %2 = tpu.matmul %0, %1, %cst {dimension_numbers = #tpu.dot_dimension_numbers<[1], [0], [0], [1], [0, 0, 1, 1], [], []>} : vector<240x100xf32>, vector<100x256xf32>, vector<240x256xf32> -> vector<240x256xf32>
    %c0_3 = arith.constant 0 : index
    %c0_4 = arith.constant 0 : index
    %3 = vector.load %arg3[%c0_3, %c0_4] : memref<1x256xf32, #tpu.memory_space<vmem>>, vector<1x256xf32>
    %4 = vector.broadcast %3 : vector<1x256xf32> to vector<240x256xf32>
    %5 = arith.addf %2, %4 : vector<240x256xf32>
    %c0_5 = arith.constant 0 : index
    %c0_6 = arith.constant 0 : index
    %6 = vector.load %arg4[%c0_5, %c0_6] : memref<240x256xf32, #tpu.memory_space<vmem>>, vector<240x256xf32>
    tpu.vector_store %arg4[%c0_5, %c0_6], %5 {strides = array<i32>} : memref<240x256xf32, #tpu.memory_space<vmem>>, vector<240x256xf32>,
    return
  }
  func.func @transform_0(%arg0: i32) -> (i32, i32) {
    %c0_i32 = arith.constant 0 : i32
    %c0_i32_0 = arith.constant 0 : i32
    return %arg0, %c0_i32 : i32, i32
  }
  func.func @transform_1(%arg0: i32) -> (i32, i32) {
    %c0_i32 = arith.constant 0 : i32
    %c0_i32_0 = arith.constant 0 : i32
    %c0_i32_1 = arith.constant 0 : i32
    return %c0_i32, %c0_i32_0 : i32, i32
  }
  func.func @transform_2(%arg0: i32) -> (i32, i32) {
    %c0_i32 = arith.constant 0 : i32
    %c0_i32_0 = arith.constant 0 : i32
    %c0_i32_1 = arith.constant 0 : i32
    return %c0_i32, %c0_i32_0 : i32, i32
  }
  func.func @transform_3(%arg0: i32) -> (i32, i32) {
    %c0_i32 = arith.constant 0 : i32
    %c0_i32_0 = arith.constant 0 : i32
    return %arg0, %c0_i32 : i32, i32
  }
}

</mosaic_0001>

<llo_original>
// kernel: tpu_custom_call.1
$region0: #{tpu_custom_call.1}
  #allocation0 [shape = 'u32[]', space=smem, size = 0x4, offset = 0x4, fixed_abs, tag = 'smem constant byte address 0x4 - core index']
  #allocation1 [shape = 'u32[144,128]{1,0:T(1,128)}', space=vmem, size = 0x12000, scoped, tag = 'internal scratch']
  %s0 = inlined_call_operand.vmem [shape: f32[240,100], index: 0, kind: input, shape index: {}]
  %s1 = inlined_call_operand.vmem [shape: f32[100,256], index: 1, kind: input, shape index: {}]
  %s2 = inlined_call_operand.vmem [shape: f32[1,256], index: 2, kind: input, shape index: {}]
  %s3 = inlined_call_operand.hbm [shape: f32[240,256], index: 3, kind: output, shape index: {}]
  %s4 = sld [smem:[#allocation0]]
  $region22: #{tpu_custom_call.1} parent=0
    _
  %s6 = ssub.s32 1, %s4
  %s7 = scalar_select 0, %s6, %s4
  $region1: #{tpu_custom_call.1} parent=0
    #allocation2 [shape = 'u8[245760]{0}', space=vmem, size = 0x3c000, scoped, tag = 'output window, operand 0, single buffered']
    #allocation3 [shape = 's32[1]{0}', space=sflag, size = 0x4, scoped, tag = 'scoped memory for tpu_custom_call.1']
    %8 = vsyncpa [#allocation3], 0
    // Predicated region
    $region2: #{tpu_custom_call.1} parent=1 // pred_check
      _
    $region3: #{tpu_custom_call.1} parent=1 // pred_check_branch
      %10 = sbr.rel (0) target = $region5
    $region4: #{tpu_custom_call.1} parent=1 // pred_region
      _
    $region5: #{tpu_custom_call.1} parent=1 // pred_fallthru
      _
    // Predicated region
    $region6: #{tpu_custom_call.1} parent=1 // pred_check
      _
    $region7: #{tpu_custom_call.1} parent=1 // pred_check_branch
      %12 = sbr.rel (0) target = $region9
    $region8: #{tpu_custom_call.1} parent=1 // pred_region
      _
    $region9: #{tpu_custom_call.1} parent=1 // pred_fallthru
      _
    // Predicated region
    $region10: #{tpu_custom_call.1} parent=1 // pred_check
      _
    $region11: #{tpu_custom_call.1} parent=1 // pred_check_branch
      %14 = sbr.rel (0) target = $region13
    $region12: #{tpu_custom_call.1} parent=1 // pred_region
      _
    $region13: #{tpu_custom_call.1} parent=1 // pred_fallthru
      _
    %v15 = vld [vmem:[%s0] sm:$0xff]
    %v16 = vld [vmem:[%s0 + $0x8] sm:$0xff]
    %v17 = vld [vmem:[%s0 + $0x10] sm:$0xff]
    %v18 = vld [vmem:[%s0 + $0x18] sm:$0xff]
    %v19 = vld [vmem:[%s0 + $0x20] sm:$0xff]
    %v20 = vld [vmem:[%s0 + $0x28] sm:$0xff]
    %v21 = vld [vmem:[%s0 + $0x30] sm:$0xff]
    %v22 = vld [vmem:[%s0 + $0x38] sm:$0xff]
    %v23 = vld [vmem:[%s0 + $0x40] sm:$0xff]
    %v24 = vld [vmem:[%s0 + $0x48] sm:$0xff]
    %v25 = vld [vmem:[%s0 + $0x50] sm:$0xff]
    %v26 = vld [vmem:[%s0 + $0x58] sm:$0xff]
    %v27 = vld [vmem:[%s0 + $0x60] sm:$0xff]
    %v28 = vld [vmem:[%s0 + $0x68] sm:$0xff]
    %v29 = vld [vmem:[%s0 + $0x70] sm:$0xff]
    %v30 = vld [vmem:[%s0 + $0x78] sm:$0xff]
    %v31 = vld [vmem:[%s0 + $0x80] sm:$0xff]
    %v32 = vld [vmem:[%s0 + $0x88] sm:$0xff]
    %v33 = vld [vmem:[%s0 + $0x90] sm:$0xff]
    %v34 = vld [vmem:[%s0 + $0x98] sm:$0xff]
    %v35 = vld [vmem:[%s0 + $0xa0] sm:$0xff]
    %v36 = vld [vmem:[%s0 + $0xa8] sm:$0xff]
    %v37 = vld [vmem:[%s0 + $0xb0] sm:$0xff]
    %v38 = vld [vmem:[%s0 + $0xb8] sm:$0xff]
    %v39 = vld [vmem:[%s0 + $0xc0] sm:$0xff]
    %v40 = vld [vmem:[%s0 + $0xc8] sm:$0xff]
    %v41 = vld [vmem:[%s0 + $0xd0] sm:$0xff]
    %v42 = vld [vmem:[%s0 + $0xd8] sm:$0xff]
    %v43 = vld [vmem:[%s0 + $0xe0] sm:$0xff]
    %v44 = vld [vmem:[%s0 + $0xe8] sm:$0xff]
    %v45 = vld [vmem:[%s1] sm:$0xff]
    %v46 = vld [vmem:[%s1 + $0x8] sm:$0xff]
    %v47 = vld [vmem:[%s1 + $0x10] sm:$0xff]
    %v48 = vld [vmem:[%s1 + $0x18] sm:$0xff]
    %v49 = vld [vmem:[%s1 + $0x20] sm:$0xff]
    %v50 = vld [vmem:[%s1 + $0x28] sm:$0xff]
    %v51 = vld [vmem:[%s1 + $0x30] sm:$0xff]
    %v52 = vld [vmem:[%s1 + $0x38] sm:$0xff]
    %v53 = vld [vmem:[%s1 + $0x40] sm:$0xff]
    %v54 = vld [vmem:[%s1 + $0x48] sm:$0xff]
    %v55 = vld [vmem:[%s1 + $0x50] sm:$0xff]
    %v56 = vld [vmem:[%s1 + $0x58] sm:$0xff]
    %v57 = vld [vmem:[%s1 + $0x60] sm:$0xff]
    %v58 = vld [vmem:[%s1 + $0x68] sm:$0xff]
    %v59 = vld [vmem:[%s1 + $0x70] sm:$0xff]
    %v60 = vld [vmem:[%s1 + $0x78] sm:$0xff]
    %v61 = vld [vmem:[%s1 + $0x80] sm:$0xff]
    %v62 = vld [vmem:[%s1 + $0x88] sm:$0xff]
    %v63 = vld [vmem:[%s1 + $0x90] sm:$0xff]
    %v64 = vld [vmem:[%s1 + $0x98] sm:$0xff]
    %v65 = vld [vmem:[%s1 + $0xa0] sm:$0xff]
    %v66 = vld [vmem:[%s1 + $0xa8] sm:$0xff]
    %v67 = vld [vmem:[%s1 + $0xb0] sm:$0xff]
    %v68 = vld [vmem:[%s1 + $0xb8] sm:$0xff]
    %v69 = vld [vmem:[%s1 + $0xc0] sm:$0xf]
    %v70 = vld [vmem:[%s1 + $0xc8] sm:$0xf]
    %v71 = vld [vmem:[%s2] sm:$0x3]
    %v73 = vlaneseq
    %v74 = vshrl.u32 %v73, 7
    %v75 = vsub.s32 0, %v74
    %v76 = vrot.slane %v71, %v75
    %v77 = vlaneseq
    %v78 = vshrl.u32 %v77, 7
    %v79 = vsub.s32 1, %v78
    %v80 = vrot.slane %v71, %v79
    %vm83 = vcmask 818176
    %v85 = vsel %vm83, %v15, 0
    %v88 = vsel %vm83, %v16, 0
    %v91 = vsel %vm83, %v17, 0
    %v94 = vsel %vm83, %v18, 0
    %v97 = vsel %vm83, %v19, 0
    %v100 = vsel %vm83, %v20, 0
    %v103 = vsel %vm83, %v21, 0
    %v106 = vsel %vm83, %v22, 0
    %v109 = vsel %vm83, %v23, 0
    %v112 = vsel %vm83, %v24, 0
    %v115 = vsel %vm83, %v25, 0
    %v118 = vsel %vm83, %v26, 0
    %v121 = vsel %vm83, %v27, 0
    %v124 = vsel %vm83, %v28, 0
    %v127 = vsel %vm83, %v29, 0
    %v130 = vsel %vm83, %v30, 0
    %v133 = vsel %vm83, %v31, 0
    %v136 = vsel %vm83, %v32, 0
    %v139 = vsel %vm83, %v33, 0
    %v142 = vsel %vm83, %v34, 0
    %v145 = vsel %vm83, %v35, 0
    %v148 = vsel %vm83, %v36, 0
    %v151 = vsel %vm83, %v37, 0
    %v154 = vsel %vm83, %v38, 0
    %v157 = vsel %vm83, %v39, 0
    %v160 = vsel %vm83, %v40, 0
    %v163 = vsel %vm83, %v41, 0
    %v166 = vsel %vm83, %v42, 0
    %v169 = vsel %vm83, %v43, 0
    %v172 = vsel %vm83, %v44, 0
    %vm174 = vcmask 1043456
    %v176 = vsel %vm174, %v69, 0
    %v179 = vsel %vm174, %v70, 0
    %181 = vmatprep.subr.mxu0 0.0
    %182 = vmatpush1.msra.mxu0 0.0
    %183 = vmatprep.subr.mxu0 0.0
    %184 = vmatpush1.msra.mxu0 0.0
    %185 = vmatprep.subr.mxu0 0.0
    %186 = vmatpush1.msra.mxu0 0.0
    %187 = vmatprep.subr.mxu0 %v179
    %188 = vmatpush1.msra.mxu0 %v176
    %189 = vmatprep.subr.mxu0 %v68
    %190 = vmatpush1.msra.mxu0 %v67
    %191 = vmatprep.subr.mxu0 %v66
    %192 = vmatpush1.msra.mxu0 %v65
    %193 = vmatprep.subr.mxu0 %v64
    %194 = vmatpush1.msra.mxu0 %v63
    %195 = vmatprep.subr.mxu0 %v62
    %196 = vmatpush1.msra.mxu0 %v61
    %197 = vmatprep.subr.mxu0 %v60
    %198 = vmatpush1.msra.mxu0 %v59
    %199 = vmatprep.subr.mxu0 %v58
    %200 = vmatpush1.msra.mxu0 %v57
    %201 = vmatprep.subr.mxu0 %v56
    %202 = vmatpush1.msra.mxu0 %v55
    %203 = vmatprep.subr.mxu0 %v54
    %204 = vmatpush1.msra.mxu0 %v53
    %205 = vmatprep.subr.mxu0 %v52
    %206 = vmatpush1.msra.mxu0 %v51
    %207 = vmatprep.subr.mxu0 %v50
    %208 = vmatpush1.msra.mxu0 %v49
    %209 = vmatprep.subr.mxu0 %v48
    %210 = vmatpush1.msra.mxu0 %v47
    %211 = vmatprep.subr.mxu0 %v46
    %212 = vmatpush1.msra.mxu0 %v45
    %213 = vmatprep.subr.mxu0 0.0
    %214 = vmatpush2.msra.mxu0 0.0
    %215 = vmatprep.subr.mxu0 0.0
    %216 = vmatpush2.msra.mxu0 0.0
    %217 = vmatprep.subr.mxu0 0.0
    %218 = vmatpush2.msra.mxu0 0.0
    %219 = vmatprep.subr.mxu0 0.0
    %220 = vmatpush2.msra.mxu0 0.0
    %221 = vmatprep.subr.mxu0 0.0
    %222 = vmatpush2.msra.mxu0 0.0
    %223 = vmatprep.subr.mxu0 0.0
    %224 = vmatpush2.msra.mxu0 0.0
    %225 = vmatprep.subr.mxu0 0.0
    %226 = vmatpush2.msra.mxu0 0.0
    %227 = vmatprep.subr.mxu0 0.0
    %228 = vmatpush2.msra.mxu0 0.0
    %229 = vmatprep.subr.mxu0 0.0
    %230 = vmatpush2.msra.mxu0 0.0
    %231 = vmatprep.subr.mxu0 0.0
    %232 = vmatpush2.msra.mxu0 0.0
    %233 = vmatprep.subr.mxu0 0.0
    %234 = vmatpush2.msra.mxu0 0.0
    %235 = vmatprep.subr.mxu0 0.0
    %236 = vmatpush2.msra.mxu0 0.0
    %237 = vmatprep.subr.mxu0 0.0
    %238 = vmatpush2.msra.mxu0 0.0
    %239 = vmatprep.subr.mxu0 0.0
    %240 = vmatpush2.msra.mxu0 0.0
    %241 = vmatprep.subr.mxu0 0.0
    %242 = vmatpush2.msra.mxu0 0.0
    %243 = vmatprep.subr.mxu0 0.0
    %244 = vmatpush2.msra.mxu0 0.0
    %245 = vmatprep.mubr.f32.mxu0 0.0
    %246 = vmatmul.mubr.f32.gmra.mxu0 %v85
    %v247 = vpop.f32.mrf.mxu0
    %v248 = vadd.f32 %v76, %v247
    %v249 = vpop.f32.mrf.mxu0
    %v250 = vadd.f32 %v80, %v249
    %251 = vmatprep.mubr.f32.mxu0 0.0
    %252 = vmatmul.mubr.f32.gmra.mxu0 %v88
    %v253 = vpop.f32.mrf.mxu0
    %v254 = vadd.f32 %v76, %v253
    %v255 = vpop.f32.mrf.mxu0
    %v256 = vadd.f32 %v80, %v255
    %257 = vmatprep.mubr.f32.mxu0 0.0
    %258 = vmatmul.mubr.f32.gmra.mxu0 %v91
    %v259 = vpop.f32.mrf.mxu0
    %v260 = vadd.f32 %v76, %v259
    %v261 = vpop.f32.mrf.mxu0
    %v262 = vadd.f32 %v80, %v261
    %263 = vmatprep.mubr.f32.mxu0 0.0
    %264 = vmatmul.mubr.f32.gmra.mxu0 %v94
    %v265 = vpop.f32.mrf.mxu0
    %v266 = vadd.f32 %v76, %v265
    %v267 = vpop.f32.mrf.mxu0
    %v268 = vadd.f32 %v80, %v267
    %269 = vmatprep.mubr.f32.mxu0 0.0
    %270 = vmatmul.mubr.f32.gmra.mxu0 %v97
    %v271 = vpop.f32.mrf.mxu0
    %v272 = vadd.f32 %v76, %v271
    %v273 = vpop.f32.mrf.mxu0
    %v274 = vadd.f32 %v80, %v273
    %275 = vmatprep.mubr.f32.mxu0 0.0
    %276 = vmatmul.mubr.f32.gmra.mxu0 %v100
    %v277 = vpop.f32.mrf.mxu0
    %v278 = vadd.f32 %v76, %v277
    %v279 = vpop.f32.mrf.mxu0
    %v280 = vadd.f32 %v80, %v279
    %281 = vmatprep.mubr.f32.mxu0 0.0
    %282 = vmatmul.mubr.f32.gmra.mxu0 %v103
    %v283 = vpop.f32.mrf.mxu0
    %v284 = vadd.f32 %v76, %v283
    %v285 = vpop.f32.mrf.mxu0
    %v286 = vadd.f32 %v80, %v285
    %287 = vmatprep.mubr.f32.mxu0 0.0
    %288 = vmatmul.mubr.f32.gmra.mxu0 %v106
    %v289 = vpop.f32.mrf.mxu0
    %v290 = vadd.f32 %v76, %v289
    %v291 = vpop.f32.mrf.mxu0
    %v292 = vadd.f32 %v80, %v291
    %293 = vmatprep.mubr.f32.mxu0 0.0
    %294 = vmatmul.mubr.f32.gmra.mxu0 %v109
    %v295 = vpop.f32.mrf.mxu0
    %v296 = vadd.f32 %v76, %v295
    %v297 = vpop.f32.mrf.mxu0
    %v298 = vadd.f32 %v80, %v297
    %299 = vmatprep.mubr.f32.mxu0 0.0
    %300 = vmatmul.mubr.f32.gmra.mxu0 %v112
    %v301 = vpop.f32.mrf.mxu0
    %v302 = vadd.f32 %v76, %v301
    %v303 = vpop.f32.mrf.mxu0
    %v304 = vadd.f32 %v80, %v303
    %305 = vmatprep.mubr.f32.mxu0 0.0
    %306 = vmatmul.mubr.f32.gmra.mxu0 %v115
    %v307 = vpop.f32.mrf.mxu0
    %v308 = vadd.f32 %v76, %v307
    %v309 = vpop.f32.mrf.mxu0
    %v310 = vadd.f32 %v80, %v309
    %311 = vmatprep.mubr.f32.mxu0 0.0
    %312 = vmatmul.mubr.f32.gmra.mxu0 %v118
    %v313 = vpop.f32.mrf.mxu0
    %v314 = vadd.f32 %v76, %v313
    %v315 = vpop.f32.mrf.mxu0
    %v316 = vadd.f32 %v80, %v315
    %317 = vmatprep.mubr.f32.mxu0 0.0
    %318 = vmatmul.mubr.f32.gmra.mxu0 %v121
    %v319 = vpop.f32.mrf.mxu0
    %v320 = vadd.f32 %v76, %v319
    %v321 = vpop.f32.mrf.mxu0
    %v322 = vadd.f32 %v80, %v321
    %323 = vmatprep.mubr.f32.mxu0 0.0
    %324 = vmatmul.mubr.f32.gmra.mxu0 %v124
    %v325 = vpop.f32.mrf.mxu0
    %v326 = vadd.f32 %v76, %v325
    %v327 = vpop.f32.mrf.mxu0
    %v328 = vadd.f32 %v80, %v327
    %329 = vmatprep.mubr.f32.mxu0 0.0
    %330 = vmatmul.mubr.f32.gmra.mxu0 %v127
    %v331 = vpop.f32.mrf.mxu0
    %v332 = vadd.f32 %v76, %v331
    %v333 = vpop.f32.mrf.mxu0
    %v334 = vadd.f32 %v80, %v333
    %335 = vmatprep.mubr.f32.mxu0 0.0
    %336 = vmatmul.mubr.f32.gmra.mxu0 %v130
    %v337 = vpop.f32.mrf.mxu0
    %v338 = vadd.f32 %v76, %v337
    %v339 = vpop.f32.mrf.mxu0
    %v340 = vadd.f32 %v80, %v339
    %341 = vmatprep.mubr.f32.mxu0 0.0
    %342 = vmatmul.mubr.f32.gmra.mxu0 %v133
    %v343 = vpop.f32.mrf.mxu0
    %v344 = vadd.f32 %v76, %v343
    %v345 = vpop.f32.mrf.mxu0
    %v346 = vadd.f32 %v80, %v345
    %347 = vmatprep.mubr.f32.mxu0 0.0
    %348 = vmatmul.mubr.f32.gmra.mxu0 %v136
    %v349 = vpop.f32.mrf.mxu0
    %v350 = vadd.f32 %v76, %v349
    %v351 = vpop.f32.mrf.mxu0
    %v352 = vadd.f32 %v80, %v351
    %353 = vmatprep.mubr.f32.mxu0 0.0
    %354 = vmatmul.mubr.f32.gmra.mxu0 %v139
    %v355 = vpop.f32.mrf.mxu0
    %v356 = vadd.f32 %v76, %v355
    %v357 = vpop.f32.mrf.mxu0
    %v358 = vadd.f32 %v80, %v357
    %359 = vmatprep.mubr.f32.mxu0 0.0
    %360 = vmatmul.mubr.f32.gmra.mxu0 %v142
    %v361 = vpop.f32.mrf.mxu0
    %v362 = vadd.f32 %v76, %v361
    %v363 = vpop.f32.mrf.mxu0
    %v364 = vadd.f32 %v80, %v363
    %365 = vmatprep.mubr.f32.mxu0 0.0
    %366 = vmatmul.mubr.f32.gmra.mxu0 %v145
    %v367 = vpop.f32.mrf.mxu0
    %v368 = vadd.f32 %v76, %v367
    %v369 = vpop.f32.mrf.mxu0
    %v370 = vadd.f32 %v80, %v369
    %371 = vmatprep.mubr.f32.mxu0 0.0
    %372 = vmatmul.mubr.f32.gmra.mxu0 %v148
    %v373 = vpop.f32.mrf.mxu0
    %v374 = vadd.f32 %v76, %v373
    %v375 = vpop.f32.mrf.mxu0
    %v376 = vadd.f32 %v80, %v375
    %377 = vmatprep.mubr.f32.mxu0 0.0
    %378 = vmatmul.mubr.f32.gmra.mxu0 %v151
    %v379 = vpop.f32.mrf.mxu0
    %v380 = vadd.f32 %v76, %v379
    %v381 = vpop.f32.mrf.mxu0
    %v382 = vadd.f32 %v80, %v381
    %383 = vmatprep.mubr.f32.mxu0 0.0
    %384 = vmatmul.mubr.f32.gmra.mxu0 %v154
    %v385 = vpop.f32.mrf.mxu0
    %v386 = vadd.f32 %v76, %v385
    %v387 = vpop.f32.mrf.mxu0
    %v388 = vadd.f32 %v80, %v387
    %389 = vmatprep.mubr.f32.mxu0 0.0
    %390 = vmatmul.mubr.f32.gmra.mxu0 %v157
    %v391 = vpop.f32.mrf.mxu0
    %v392 = vadd.f32 %v76, %v391
    %v393 = vpop.f32.mrf.mxu0
    %v394 = vadd.f32 %v80, %v393
    %395 = vmatprep.mubr.f32.mxu0 0.0
    %396 = vmatmul.mubr.f32.gmra.mxu0 %v160
    %v397 = vpop.f32.mrf.mxu0
    %v398 = vadd.f32 %v76, %v397
    %v399 = vpop.f32.mrf.mxu0
    %v400 = vadd.f32 %v80, %v399
    %401 = vmatprep.mubr.f32.mxu0 0.0
    %402 = vmatmul.mubr.f32.gmra.mxu0 %v163
    %v403 = vpop.f32.mrf.mxu0
    %v404 = vadd.f32 %v76, %v403
    %v405 = vpop.f32.mrf.mxu0
    %v406 = vadd.f32 %v80, %v405
    %407 = vmatprep.mubr.f32.mxu0 0.0
    %408 = vmatmul.mubr.f32.gmra.mxu0 %v166
    %v409 = vpop.f32.mrf.mxu0
    %v410 = vadd.f32 %v76, %v409
    %v411 = vpop.f32.mrf.mxu0
    %v412 = vadd.f32 %v80, %v411
    %413 = vmatprep.mubr.f32.mxu0 0.0
    %414 = vmatmul.mubr.f32.gmra.mxu0 %v169
    %v415 = vpop.f32.mrf.mxu0
    %v416 = vadd.f32 %v76, %v415
    %v417 = vpop.f32.mrf.mxu0
    %v418 = vadd.f32 %v80, %v417
    %419 = vmatprep.mubr.f32.mxu0 0.0
    %420 = vmatmul.mubr.f32.gmra.mxu0 %v172
    %v421 = vpop.f32.mrf.mxu0
    %v422 = vadd.f32 %v76, %v421
    %v423 = vpop.f32.mrf.mxu0
    %v424 = vadd.f32 %v80, %v423
    %425 = vdwg.mxu0
    %426 = vst [vmem:[#allocation2] sm:$0xff] %v248
    %427 = vst [vmem:[#allocation2 + $0x8] sm:$0xff] %v250
    %428 = vst [vmem:[#allocation2 + $0x10] sm:$0xff] %v254
    %429 = vst [vmem:[#allocation2 + $0x18] sm:$0xff] %v256
    %430 = vst [vmem:[#allocation2 + $0x20] sm:$0xff] %v260
    %431 = vst [vmem:[#allocation2 + $0x28] sm:$0xff] %v262
    %432 = vst [vmem:[#allocation2 + $0x30] sm:$0xff] %v266
    %433 = vst [vmem:[#allocation2 + $0x38] sm:$0xff] %v268
    %434 = vst [vmem:[#allocation2 + $0x40] sm:$0xff] %v272
    %435 = vst [vmem:[#allocation2 + $0x48] sm:$0xff] %v274
    %436 = vst [vmem:[#allocation2 + $0x50] sm:$0xff] %v278
    %437 = vst [vmem:[#allocation2 + $0x58] sm:$0xff] %v280
    %438 = vst [vmem:[#allocation2 + $0x60] sm:$0xff] %v284
    %439 = vst [vmem:[#allocation2 + $0x68] sm:$0xff] %v286
    %440 = vst [vmem:[#allocation2 + $0x70] sm:$0xff] %v290
    %441 = vst [vmem:[#allocation2 + $0x78] sm:$0xff] %v292
    %442 = vst [vmem:[#allocation2 + $0x80] sm:$0xff] %v296
    %443 = vst [vmem:[#allocation2 + $0x88] sm:$0xff] %v298
    %444 = vst [vmem:[#allocation2 + $0x90] sm:$0xff] %v302
    %445 = vst [vmem:[#allocation2 + $0x98] sm:$0xff] %v304
    %446 = vst [vmem:[#allocation2 + $0xa0] sm:$0xff] %v308
    %447 = vst [vmem:[#allocation2 + $0xa8] sm:$0xff] %v310
    %448 = vst [vmem:[#allocation2 + $0xb0] sm:$0xff] %v314
    %449 = vst [vmem:[#allocation2 + $0xb8] sm:$0xff] %v316
    %450 = vst [vmem:[#allocation2 + $0xc0] sm:$0xff] %v320
    %451 = vst [vmem:[#allocation2 + $0xc8] sm:$0xff] %v322
    %452 = vst [vmem:[#allocation2 + $0xd0] sm:$0xff] %v326
    %453 = vst [vmem:[#allocation2 + $0xd8] sm:$0xff] %v328
    %454 = vst [vmem:[#allocation2 + $0xe0] sm:$0xff] %v332
    %455 = vst [vmem:[#allocation2 + $0xe8] sm:$0xff] %v334
    %456 = vst [vmem:[#allocation2 + $0xf0] sm:$0xff] %v338
    %457 = vst [vmem:[#allocation2 + $0xf8] sm:$0xff] %v340
    %458 = vst [vmem:[#allocation2 + $0x100] sm:$0xff] %v344
    %459 = vst [vmem:[#allocation2 + $0x108] sm:$0xff] %v346
    %460 = vst [vmem:[#allocation2 + $0x110] sm:$0xff] %v350
    %461 = vst [vmem:[#allocation2 + $0x118] sm:$0xff] %v352
    %462 = vst [vmem:[#allocation2 + $0x120] sm:$0xff] %v356
    %463 = vst [vmem:[#allocation2 + $0x128] sm:$0xff] %v358
    %464 = vst [vmem:[#allocation2 + $0x130] sm:$0xff] %v362
    %465 = vst [vmem:[#allocation2 + $0x138] sm:$0xff] %v364
    %466 = vst [vmem:[#allocation2 + $0x140] sm:$0xff] %v368
    %467 = vst [vmem:[#allocation2 + $0x148] sm:$0xff] %v370
    %468 = vst [vmem:[#allocation2 + $0x150] sm:$0xff] %v374
    %469 = vst [vmem:[#allocation2 + $0x158] sm:$0xff] %v376
    %470 = vst [vmem:[#allocation2 + $0x160] sm:$0xff] %v380
    %471 = vst [vmem:[#allocation2 + $0x168] sm:$0xff] %v382
    %472 = vst [vmem:[#allocation2 + $0x170] sm:$0xff] %v386
    %473 = vst [vmem:[#allocation2 + $0x178] sm:$0xff] %v388
    %474 = vst [vmem:[#allocation2 + $0x180] sm:$0xff] %v392
    %475 = vst [vmem:[#allocation2 + $0x188] sm:$0xff] %v394
    %476 = vst [vmem:[#allocation2 + $0x190] sm:$0xff] %v398
    %477 = vst [vmem:[#allocation2 + $0x198] sm:$0xff] %v400
    %478 = vst [vmem:[#allocation2 + $0x1a0] sm:$0xff] %v404
    %479 = vst [vmem:[#allocation2 + $0x1a8] sm:$0xff] %v406
    %480 = vst [vmem:[#allocation2 + $0x1b0] sm:$0xff] %v410
    %481 = vst [vmem:[#allocation2 + $0x1b8] sm:$0xff] %v412
    %482 = vst [vmem:[#allocation2 + $0x1c0] sm:$0xff] %v416
    %483 = vst [vmem:[#allocation2 + $0x1c8] sm:$0xff] %v418
    %484 = vst [vmem:[#allocation2 + $0x1d0] sm:$0xff] %v422
    %485 = vst [vmem:[#allocation2 + $0x1d8] sm:$0xff] %v424
    // Predicated region
    $region14: #{tpu_custom_call.1} parent=1 // pred_check
      _
    $region15: #{tpu_custom_call.1} parent=1 // pred_check_branch
      %487 = sbr.rel (0) target = $region17
    $region16: #{tpu_custom_call.1} parent=1 // pred_region
      %s489 = ssub.s32 7680, 7680
      %490 = vsyncadd [#allocation3], %s489
      %s491 = sshll.u32 [#allocation2], 4
      %s492 = int_to_ptr.vmem [resolvable:$true] %s491
      %497 = dma.vmem_to_hbm [thread:$0]  %s492, 7680, %s3, [#allocation3], 256, 256, 16
    $region17: #{tpu_custom_call.1} parent=1 // pred_fallthru
      _
    // Predicated region
    $region18: #{tpu_custom_call.1} parent=1 // pred_check
      _
    $region19: #{tpu_custom_call.1} parent=1 // pred_check_branch
      %499 = sbr.rel (0) target = $region21
    $region20: #{tpu_custom_call.1} parent=1 // pred_region
      %500 = dma.done [#allocation3], 7680
    $region21: #{tpu_custom_call.1} parent=1 // pred_fallthru
      _
    %501 = vsyncpa [#allocation3], 1

</llo_original>
